<compile_context>
chip_gen: v5e
topology: v5e:2x2
jax: 0.10.0
libtpu: 0.0.40
codegen_flags: <defaults>
</compile_context>

<pallas_src>
import jax
import jax.numpy as jnp
from jax.experimental import pallas as pl
from jax.experimental.pallas import tpu as pltpu


def mlp_kernel(xT_ref, w1t_ref, b1_ref, w2t_ref, b2_ref, oT_ref):
    # Hidden layer: (4, 11) @ (11, TILE_B) -> (4, TILE_B); batch lives in the lane dim.
    h = jnp.dot(w1t_ref[...], xT_ref[...], preferred_element_type=jnp.float32)
    h = jnp.tanh(h + b1_ref[...])  # bias (4, 1) broadcasts along lanes
    # Output layer: (3, 4) @ (4, TILE_B) -> (3, TILE_B)
    out = jnp.dot(w2t_ref[...], h, preferred_element_type=jnp.float32) + b2_ref[...]
    oT_ref[...] = out.astype(oT_ref.dtype)


def _pick_tiling(batch, target_tile):
    """Choose (tile_b, n_tiles) with tile_b a multiple of 128, tile_b <= 32768,
    minimal tail padding, and >= 2 tiles whenever batch > 128 (v7x megacore)."""
    target_tile = max(128, min(32768, (target_tile // 128) * 128))
    rows128 = pl.cdiv(batch, 128)                      # batch in 128-row groups
    n_tiles = pl.cdiv(rows128, target_tile // 128)     # tiles needed at target size
    n_tiles = max(n_tiles, min(2, rows128))            # >=2 tiles if batch > 128
    tile_b = pl.cdiv(rows128, n_tiles) * 128           # <= target_tile by construction
    return tile_b, n_tiles


def simple_cnn_forward_fm(xT, w1, b1, w2, b2, *, target_tile=32768):
    """Feature-major core: xT (11, B) -> (3, B).  No wrapper-side transposes."""
    in_f, B = xT.shape
    hid_f = w1.shape[1]
    out_f = w2.shape[1]

    tile_b, n_tiles = _pick_tiling(B, target_tile)
    b_pad = n_tiles * tile_b
    if b_pad != B:
        xT = jnp.pad(xT, ((0, 0), (0, b_pad - B)))     # pad rows are sliced off below

    # Layout plumbing for the tiny params (negligible bytes).
    w1T = w1.T                    # (4, 11)
    w2T = w2.T                    # (3, 4)
    b1c = b1.reshape(hid_f, 1)    # (4, 1)
    b2c = b2.reshape(out_f, 1)    # (3, 1)

    cost = pl.CostEstimate(
        flops=2 * b_pad * (in_f * hid_f + hid_f * out_f),
        transcendentals=b_pad * hid_f,
        bytes_accessed=b_pad * (in_f + out_f) * 4
        + (in_f * hid_f + hid_f + hid_f * out_f + out_f) * 4,
    )

    outT = pl.pallas_call(
        mlp_kernel,
        out_shape=jax.ShapeDtypeStruct((out_f, b_pad), xT.dtype),
        grid=(n_tiles,),
        in_specs=[
            # x^T tile: full feature dim, one batch tile per grid step (auto-pipelined).
            pl.BlockSpec((in_f, tile_b), lambda i: (0, i)),
            # Weights / biases: full-array blocks, constant index_map -> VMEM-resident.
            pl.BlockSpec((hid_f, in_f), lambda i: (0, 0)),
            pl.BlockSpec((hid_f, 1), lambda i: (0, 0)),
            pl.BlockSpec((out_f, hid_f), lambda i: (0, 0)),
            pl.BlockSpec((out_f, 1), lambda i: (0, 0)),
        ],
        out_specs=pl.BlockSpec((out_f, tile_b), lambda i: (0, i)),
        compiler_params=pltpu.CompilerParams(
            dimension_semantics=("parallel",),
        ),
        cost_estimate=cost,
    )(xT, w1T, b1c, w2T, b2c)

    return outT[:, :B]


def simple_cnn_forward(x, w1, b1, w2, b2, *, target_tile=32768):
    """PyTorch-layout wrapper: x (B, 11) -> (B, 3).

    The x transpose and output transpose are the dominant extra HBM traffic; callers
    that can keep a feature-major layout should use simple_cnn_forward_fm directly.
    """
    outT = simple_cnn_forward_fm(x.T, w1, b1, w2, b2, target_tile=target_tile)
    return outT.T


def init_params(key):
    # Deterministic init mimicking PyTorch nn.Linear: U(-1/sqrt(fan_in), 1/sqrt(fan_in)).
    # Weights stored as (in, out), i.e. transposed relative to PyTorch's (out, in).
    k1, k2, k3, k4 = jax.random.split(key, 4)
    in1, out1 = 11, 4
    in2, out2 = 4, 3
    lim1 = 1.0 / jnp.sqrt(in1)
    lim2 = 1.0 / jnp.sqrt(in2)
    w1 = jax.random.uniform(k1, (in1, out1), jnp.float32, -lim1, lim1)
    b1 = jax.random.uniform(k2, (out1,), jnp.float32, -lim1, lim1)
    w2 = jax.random.uniform(k3, (in2, out2), jnp.float32, -lim2, lim2)
    b2 = jax.random.uniform(k4, (out2,), jnp.float32, -lim2, lim2)
    return w1, b1, w2, b2


if __name__ == "__main__":
    key = jax.random.PRNGKey(0)
    kx, kx2, kp = jax.random.split(key, 3)

    w1, b1, w2, b2 = init_params(kp)

    # Small batch (single 128-wide tile, exercises the tail-padding path).
    batch = 8
    x = jax.random.normal(kx, (batch, 11), jnp.float32)
    out = jax.block_until_ready(simple_cnn_forward(x, w1, b1, w2, b2))
    ref = jnp.tanh(x @ w1 + b1) @ w2 + b2
    assert out.shape == (batch, 3)
    assert jnp.allclose(out, ref, atol=1e-4, rtol=1e-4)

    # Moderate batch: >= 2 grid tiles (megacore path) + non-multiple-of-128 remainder.
    batch2 = 300
    x2 = jax.random.normal(kx2, (batch2, 11), jnp.float32)
    out2 = jax.block_until_ready(simple_cnn_forward(x2, w1, b1, w2, b2))
    ref2 = jnp.tanh(x2 @ w1 + b1) @ w2 + b2
    assert out2.shape == (batch2, 3)
    assert jnp.allclose(out2, ref2, atol=1e-4, rtol=1e-4)

    print("KERNEL_OK")
</pallas_src>

<mosaic_0001>
module attributes {stable_mosaic.version = 11 : i64} {
  func.func @mlp_kernel(%arg0: i32, %arg1: memref<11x128xf32, #tpu.memory_space<vmem>>, %arg2: memref<4x11xf32, #tpu.memory_space<vmem>>, %arg3: memref<4x1xf32, #tpu.memory_space<vmem>>, %arg4: memref<3x4xf32, #tpu.memory_space<vmem>>, %arg5: memref<3x1xf32, #tpu.memory_space<vmem>>, %arg6: memref<3x128xf32, #tpu.memory_space<vmem>>) attributes {dimension_semantics = [#tpu.dimension_semantics<parallel>], iteration_bounds = array<i64: 1>, scalar_prefetch = 0 : i64, scratch_operands = 0 : i64, tpu.core_type = #tpu.core_type<tc>, window_params = [{transform_indices = @transform_0, window_bounds = array<i64: 11, 128>}, {pipeline_mode = #tpu.pipeline_mode<synchronous>, transform_indices = @transform_1, window_bounds = array<i64: 4, 11>}, {pipeline_mode = #tpu.pipeline_mode<synchronous>, transform_indices = @transform_2, window_bounds = array<i64: 4, 1>}, {pipeline_mode = #tpu.pipeline_mode<synchronous>, transform_indices = @transform_3, window_bounds = array<i64: 3, 4>}, {pipeline_mode = #tpu.pipeline_mode<synchronous>, transform_indices = @transform_4, window_bounds = array<i64: 3, 1>}, {transform_indices = @transform_5, window_bounds = array<i64: 3, 128>}]} {
    %c0 = arith.constant 0 : index
    %c0_0 = arith.constant 0 : index
    %0 = vector.load %arg2[%c0, %c0_0] : memref<4x11xf32, #tpu.memory_space<vmem>>, vector<4x11xf32>
    %c0_1 = arith.constant 0 : index
    %c0_2 = arith.constant 0 : index
    %1 = vector.load %arg1[%c0_1, %c0_2] : memref<11x128xf32, #tpu.memory_space<vmem>>, vector<11x128xf32>
    %cst = arith.constant dense<0.000000e+00> : vector<4x128xf32>
    %2 = tpu.matmul %0, %1, %cst {dimension_numbers = #tpu.dot_dimension_numbers<[1], [0], [0], [1], [0, 0, 1, 1], [], []>} : vector<4x11xf32>, vector<11x128xf32>, vector<4x128xf32> -> vector<4x128xf32>
    %c0_3 = arith.constant 0 : index
    %c0_4 = arith.constant 0 : index
    %3 = vector.load %arg3[%c0_3, %c0_4] : memref<4x1xf32, #tpu.memory_space<vmem>>, vector<4x1xf32>
    %4 = vector.broadcast %3 : vector<4x1xf32> to vector<4x128xf32>
    %5 = arith.addf %2, %4 : vector<4x128xf32>
    %6 = math.tanh %5 : vector<4x128xf32>
    %c0_5 = arith.constant 0 : index
    %c0_6 = arith.constant 0 : index
    %7 = vector.load %arg4[%c0_5, %c0_6] : memref<3x4xf32, #tpu.memory_space<vmem>>, vector<3x4xf32>
    %cst_7 = arith.constant dense<0.000000e+00> : vector<3x128xf32>
    %8 = tpu.matmul %7, %6, %cst_7 {dimension_numbers = #tpu.dot_dimension_numbers<[1], [0], [0], [1], [0, 0, 1, 1], [], []>} : vector<3x4xf32>, vector<4x128xf32>, vector<3x128xf32> -> vector<3x128xf32>
    %c0_8 = arith.constant 0 : index
    %c0_9 = arith.constant 0 : index
    %9 = vector.load %arg5[%c0_8, %c0_9] : memref<3x1xf32, #tpu.memory_space<vmem>>, vector<3x1xf32>
    %10 = vector.broadcast %9 : vector<3x1xf32> to vector<3x128xf32>
    %11 = arith.addf %8, %10 : vector<3x128xf32>
    %c0_10 = arith.constant 0 : index
    %c0_11 = arith.constant 0 : index
    %12 = vector.load %arg6[%c0_10, %c0_11] : memref<3x128xf32, #tpu.memory_space<vmem>>, vector<3x128xf32>
    tpu.vector_store %arg6[%c0_10, %c0_11], %11 {strides = array<i32>} : memref<3x128xf32, #tpu.memory_space<vmem>>, vector<3x128xf32>,
    return
  }
  func.func @transform_0(%arg0: i32) -> (i32, i32) {
    %c0_i32 = arith.constant 0 : i32
    %c0_i32_0 = arith.constant 0 : i32
    return %c0_i32, %arg0 : i32, i32
  }
  func.func @transform_1(%arg0: i32) -> (i32, i32) {
    %c0_i32 = arith.constant 0 : i32
    %c0_i32_0 = arith.constant 0 : i32
    %c0_i32_1 = arith.constant 0 : i32
    return %c0_i32, %c0_i32_0 : i32, i32
  }
  func.func @transform_2(%arg0: i32) -> (i32, i32) {
    %c0_i32 = arith.constant 0 : i32
    %c0_i32_0 = arith.constant 0 : i32
    %c0_i32_1 = arith.constant 0 : i32
    return %c0_i32, %c0_i32_0 : i32, i32
  }
  func.func @transform_3(%arg0: i32) -> (i32, i32) {
    %c0_i32 = arith.constant 0 : i32
    %c0_i32_0 = arith.constant 0 : i32
    %c0_i32_1 = arith.constant 0 : i32
    return %c0_i32, %c0_i32_0 : i32, i32
  }
  func.func @transform_4(%arg0: i32) -> (i32, i32) {
    %c0_i32 = arith.constant 0 : i32
    %c0_i32_0 = arith.constant 0 : i32
    %c0_i32_1 = arith.constant 0 : i32
    return %c0_i32, %c0_i32_0 : i32, i32
  }
  func.func @transform_5(%arg0: i32) -> (i32, i32) {
    %c0_i32 = arith.constant 0 : i32
    %c0_i32_0 = arith.constant 0 : i32
    return %c0_i32, %arg0 : i32, i32
  }
}

</mosaic_0001>

<llo_original>
// kernel: tpu_custom_call.1
$region0: #{tpu_custom_call.1}
  #allocation0 [shape = 'u32[]', space=smem, size = 0x4, offset = 0x4, fixed_abs, tag = 'smem constant byte address 0x4 - core index']
  #allocation1 [shape = 'u32[72,128]{1,0:T(1,128)}', space=vmem, size = 0x9000, scoped, tag = 'internal scratch']
  %s0 = inlined_call_operand.hbm [shape: f32[11,128], index: 0, kind: input, shape index: {}]
  %s1 = inlined_call_operand.vmem [shape: f32[4,11], index: 1, kind: input, shape index: {}]
  %s2 = inlined_call_operand.vmem [shape: f32[4,1], index: 2, kind: input, shape index: {}]
  %s3 = inlined_call_operand.vmem [shape: f32[3,4], index: 3, kind: input, shape index: {}]
  %s4 = inlined_call_operand.vmem [shape: f32[3,1], index: 4, kind: input, shape index: {}]
  %s5 = inlined_call_operand.hbm [shape: f32[3,128], index: 5, kind: output, shape index: {}]
  %s6 = sld [smem:[#allocation0]]
  $region34: #{tpu_custom_call.1} parent=0
    _
  %s8 = ssub.s32 1, %s6
  %s9 = scalar_select 0, %s8, %s6
  $region1: #{tpu_custom_call.1} parent=0
    #allocation2 [shape = 'u8[8192]{0}', space=vmem, size = 0x2000, scoped, tag = 'input window, operand 0, single buffered']
    #allocation3 [shape = 's32[1]{0}', space=sflag, size = 0x4, scoped, tag = 'scoped memory for tpu_custom_call.1']
    #allocation4 [shape = 's32[1]{0}', space=sflag, size = 0x4, scoped, tag = 'scoped memory for tpu_custom_call.1']
    #allocation5 [shape = 'u8[2048]{0}', space=vmem, size = 0x800, scoped, tag = 'output window, operand 0, single buffered']
    %10 = vsyncpa [#allocation3], 0
    %11 = vsyncpa [#allocation4], 0
    // Predicated region
    $region2: #{tpu_custom_call.1} parent=1 // pred_check
      _
    $region3: #{tpu_custom_call.1} parent=1 // pred_check_branch
      %13 = sbr.rel (0) target = $region5
    $region4: #{tpu_custom_call.1} parent=1 // pred_region
      %15 = vsyncadd [#allocation3], 0
      %s16 = sshll.u32 %s0, 4
      %s17 = int_to_ptr.hbm [resolvable:$true] %s16
      %s18 = sshll.u32 [#allocation2], 4
      %s19 = int_to_ptr.vmem [resolvable:$true] %s18
      %24 = dma.hbm_to_vmem [thread:$0]  %s17, 256, %s19, [#allocation3], 128, 128, 8
    $region5: #{tpu_custom_call.1} parent=1 // pred_fallthru
      _
    // Predicated region
    $region6: #{tpu_custom_call.1} parent=1 // pred_check
      _
    $region7: #{tpu_custom_call.1} parent=1 // pred_check_branch
      %26 = sbr.rel (0) target = $region9
    $region8: #{tpu_custom_call.1} parent=1 // pred_region
      _
    $region9: #{tpu_custom_call.1} parent=1 // pred_fallthru
      _
    // Predicated region
    $region10: #{tpu_custom_call.1} parent=1 // pred_check
      _
    $region11: #{tpu_custom_call.1} parent=1 // pred_check_branch
      %28 = sbr.rel (0) target = $region13
    $region12: #{tpu_custom_call.1} parent=1 // pred_region
      _
    $region13: #{tpu_custom_call.1} parent=1 // pred_fallthru
      _
    // Predicated region
    $region14: #{tpu_custom_call.1} parent=1 // pred_check
      _
    $region15: #{tpu_custom_call.1} parent=1 // pred_check_branch
      %30 = sbr.rel (0) target = $region17
    $region16: #{tpu_custom_call.1} parent=1 // pred_region
      _
    $region17: #{tpu_custom_call.1} parent=1 // pred_fallthru
      _
    // Predicated region
    $region18: #{tpu_custom_call.1} parent=1 // pred_check
      _
    $region19: #{tpu_custom_call.1} parent=1 // pred_check_branch
      %32 = sbr.rel (0) target = $region21
    $region20: #{tpu_custom_call.1} parent=1 // pred_region
      _
    $region21: #{tpu_custom_call.1} parent=1 // pred_fallthru
      _
    // Predicated region
    $region22: #{tpu_custom_call.1} parent=1 // pred_check
      _
    $region23: #{tpu_custom_call.1} parent=1 // pred_check_branch
      %34 = sbr.rel (0) target = $region25
    $region24: #{tpu_custom_call.1} parent=1 // pred_region
      %36 = dma.done [#allocation3], 256
    $region25: #{tpu_custom_call.1} parent=1 // pred_fallthru
      _
    %v37 = vld [vmem:[%s1] sm:$0xf]
    %v38 = vld [vmem:[#allocation2] sm:$0xff]
    %v39 = vld [vmem:[#allocation2 + $0x8] sm:$0x7]
    %v40 = vld [vmem:[%s2] sm:$0xf]
    %42 = vset.pattern.permute.xlu0 0
    %43 = vperm.xlu0 %42, %v40
    %v44 = vpop.permute.xlu0 %43
    %vm46 = vcmask 89088
    %v48 = vsel %vm46, %v37, 0
    %vm50 = vcmask 1042432
    %v52 = vsel %vm50, %v39, 0
    %54 = vmatpush.msra.mxu0 0.0
    %55 = vmatpush.msra.mxu0 0.0
    %56 = vmatpush.msra.mxu0 0.0
    %57 = vmatpush.msra.mxu0 0.0
    %58 = vmatpush.msra.mxu0 0.0
    %59 = vmatpush.msra.mxu0 0.0
    %60 = vmatpush.msra.mxu0 0.0
    %61 = vmatpush.msra.mxu0 0.0
    %62 = vmatpush.msra.mxu0 0.0
    %63 = vmatpush.msra.mxu0 0.0
    %64 = vmatpush.msra.mxu0 0.0
    %65 = vmatpush.msra.mxu0 0.0
    %66 = vmatpush.msra.mxu0 0.0
    %67 = vmatpush.msra.mxu0 0.0
    %68 = vmatpush.msra.mxu0 %v52
    %69 = vmatpush.msra.mxu0 %v38
    %70 = vmatmul.f32.gmra.mxu0 %v48
    %v71 = vpop.f32.mrf.mxu0
    %v72 = vadd.f32 %v44, %v71
    %73 = vdwg.mxu0
    %v74 = vtanh.pop %v72
    %v75 = vld [vmem:[%s3] sm:$0x7]
    %v76 = vld [vmem:[%s4] sm:$0x7]
    %78 = vset.pattern.permute.xlu0 0
    %79 = vperm.xlu0 %78, %v76
    %v80 = vpop.permute.xlu0 %79
    %vm82 = vcmask 31744
    %v84 = vsel %vm82, %v75, 0
    %vm86 = vcmask 1043456
    %v88 = vsel %vm86, %v74, 0
    %90 = vmatpush.msra.mxu0 0.0
    %91 = vmatpush.msra.mxu0 0.0
    %92 = vmatpush.msra.mxu0 0.0
    %93 = vmatpush.msra.mxu0 0.0
    %94 = vmatpush.msra.mxu0 0.0
    %95 = vmatpush.msra.mxu0 0.0
    %96 = vmatpush.msra.mxu0 0.0
    %97 = vmatpush.msra.mxu0 0.0
    %98 = vmatpush.msra.mxu0 0.0
    %99 = vmatpush.msra.mxu0 0.0
    %100 = vmatpush.msra.mxu0 0.0
    %101 = vmatpush.msra.mxu0 0.0
    %102 = vmatpush.msra.mxu0 0.0
    %103 = vmatpush.msra.mxu0 0.0
    %104 = vmatpush.msra.mxu0 0.0
    %105 = vmatpush.msra.mxu0 %v88
    %106 = vmatmul.f32.gmra.mxu0 %v84
    %v107 = vpop.f32.mrf.mxu0
    %v108 = vadd.f32 %v80, %v107
    %109 = vdwg.mxu0
    %110 = vst [vmem:[#allocation5] sm:$0x7] %v108
    // Predicated region
    $region26: #{tpu_custom_call.1} parent=1 // pred_check
      _
    $region27: #{tpu_custom_call.1} parent=1 // pred_check_branch
      %112 = sbr.rel (0) target = $region29
    $region28: #{tpu_custom_call.1} parent=1 // pred_region
      %114 = vsyncadd [#allocation4], 0
      %s116 = sshll.u32 [#allocation5], 4
      %s117 = int_to_ptr.vmem [resolvable:$true] %s116
      %s118 = sshll.u32 %s5, 4
      %s119 = int_to_ptr.hbm [resolvable:$true] %s118
      %121 = dma.vmem_to_hbm [thread:$0]  %s117, 64, %s119, [#allocation4]
    $region29: #{tpu_custom_call.1} parent=1 // pred_fallthru
      _
    // Predicated region
    $region30: #{tpu_custom_call.1} parent=1 // pred_check
      _
    $region31: #{tpu_custom_call.1} parent=1 // pred_check_branch
      %123 = sbr.rel (0) target = $region33
    $region32: #{tpu_custom_call.1} parent=1 // pred_region
      %125 = dma.done [#allocation4], 64
    $region33: #{tpu_custom_call.1} parent=1 // pred_fallthru
      _
    %126 = vsyncpa [#allocation3], 1
    %127 = vsyncpa [#allocation4], 1

</llo_original>
